<compile_context>
chip_gen: v7x
topology: tpu7x:2x2x1
jax: 0.10.0
libtpu: 0.0.40
codegen_flags: <defaults>
</compile_context>

<pallas_src>
import math

import jax
import jax.numpy as jnp
from jax.experimental import pallas as pl
from jax.experimental.pallas import tpu as pltpu


def _pos_embed_kernel(embeds_ref, inv_dim_t_ref, phase_ref, out_ref):
    # embeds_ref:    (1, 2, Pt)  f32  row 0 = normalized y_embed (scale folded)
    #                                 row 1 = normalized x_embed (scale folded)
    # inv_dim_t_ref: (E, 1)      f32  1 / dim_t
    # phase_ref:     (E, 1)      f32  0 for even channels, pi/2 for odd ones
    # out_ref:       (1, 2E, Pt) f32  [pos_y | pos_x], channels x flat pixels
    E = inv_dim_t_ref.shape[0]

    inv_t = inv_dim_t_ref[...]                       # (E, 1)
    ph = phase_ref[...]                              # (E, 1)
    y_flat = embeds_ref[0, 0:1, :]                   # (1, Pt)
    x_flat = embeds_ref[0, 1:2, :]                   # (1, Pt)

    # Channel j is sin(angle_j) for even j and cos(angle_j) for odd j (note
    # dim_t[2k] == dim_t[2k+1]); cos is folded in as a +pi/2 phase so only ONE
    # transcendental per output element is evaluated.
    out_ref[0, 0:E, :] = jnp.sin(inv_t * y_flat + ph)          # pos_y half
    out_ref[0, E:2 * E, :] = jnp.sin(inv_t * x_flat + ph)      # pos_x half


def _choose_flat_tile(P, n_channels, batch, target_block_bytes=2 * 1024 * 1024):
    """Pick a lane-aligned tile Pt over the flattened pixel axis P.

    The output block is (1, n_channels, Pt) f32.  Constraint: Pt must be a
    multiple of 128 or equal to P (the full axis).  A partial last block (when
    Pt does not divide P) is handled by Pallas boundary masking.
    """
    bytes_per_px = n_channels * 4
    if P <= 128 or P * bytes_per_px <= target_block_bytes:
        pt = P                                         # one block per batch elem
    else:
        cap = max(128, (target_block_bytes // bytes_per_px) // 128 * 128)
        pt = min(cap, (P // 128) * 128)
    # With a single batch element the pixel axis is the only parallel axis:
    # keep >= 2 grid steps so write-back overlaps compute (and both v7x
    # TensorCores get work).  With B >= 2 the batch axis already covers this.
    if batch == 1 and pt == P and P > 128:
        half = (((P + 1) // 2) + 127) // 128 * 128     # ~P/2, lane-aligned, < P
        pt = min(half, P)
    return pt


def pyramid_sine_position_embedding(pixel_values, pixel_mask, *, d_model,
                                    temperature):
    """Matches PyramidSinePositionEmbedding.forward.

    pixel_values: (B, C, H, W) -- unused for compute (device placement only).
    pixel_mask:   (B, H, W)    -- integer/bool mask.
    Returns pos:  (B, d_model, H, W) float32 (NCHW, same as PyTorch).
    """
    del pixel_values  # only used by the torch module for .device
    B, H, W = pixel_mask.shape
    E = d_model // 2
    C = 2 * E
    P = H * W

    eps = 1e-6
    scale = 2.0 * math.pi

    # Cheap (B, H, W) cumsum + normalization in plain XLA (scale folded in,
    # reciprocal of the small totals only -> no per-pixel divides downstream).
    m = pixel_mask.astype(jnp.float32)
    y_embed = jnp.cumsum(m, axis=1)
    x_embed = jnp.cumsum(m, axis=2)
    y_embed = y_embed * (scale / (y_embed[:, -1:, :] + eps))
    x_embed = x_embed * (scale / (x_embed[:, :, -1:] + eps))
    embeds = jnp.stack((y_embed, x_embed), axis=1).reshape(B, 2, P)  # (B,2,P)

    # dim_t = temperature ** (2 * (i // 2) / E); per-channel phase 0 / pi/2
    # turns the even-sin / odd-cos interleave into a single sin().
    i = jnp.arange(E, dtype=jnp.float32)
    dim_t = jnp.power(jnp.float32(temperature),
                      2.0 * jnp.floor(i / 2.0) / float(E))
    inv_dim_t = (1.0 / dim_t).reshape(E, 1)
    phase = jnp.where(jnp.arange(E) % 2 == 1,
                      jnp.float32(0.5 * math.pi),
                      jnp.float32(0.0)).reshape(E, 1)

    Pt = _choose_flat_tile(P, C, B)
    n_tiles = pl.cdiv(P, Pt)

    # Precise VMEM sizing: double-buffered out + in blocks, 2x headroom.
    out_block_bytes = C * Pt * 4
    in_block_bytes = 2 * Pt * 4
    vmem_limit = int(min(32 * 1024 * 1024,
                         max(4 * 1024 * 1024,
                             4 * (out_block_bytes + in_block_bytes))))

    pos_flat = pl.pallas_call(
        _pos_embed_kernel,
        out_shape=jax.ShapeDtypeStruct((B, C, P), jnp.float32),
        grid_spec=pltpu.PrefetchScalarGridSpec(
            num_scalar_prefetch=0,
            grid=(B, n_tiles),
            in_specs=[
                pl.BlockSpec((1, 2, Pt), lambda b, t: (b, 0, t)),  # y/x embeds
                pl.BlockSpec((E, 1), lambda b, t: (0, 0)),         # 1 / dim_t
                pl.BlockSpec((E, 1), lambda b, t: (0, 0)),         # phase
            ],
            out_specs=pl.BlockSpec((1, C, Pt), lambda b, t: (b, 0, t)),
        ),
        compiler_params=pltpu.CompilerParams(
            dimension_semantics=("parallel", "parallel"),
            vmem_limit_bytes=vmem_limit),
        cost_estimate=pl.CostEstimate(
            flops=4 * B * C * P,
            transcendentals=B * C * P,
            bytes_accessed=B * C * P * 4 + B * 2 * P * 4 + 2 * E * 4),
        # TODO(synk): cast the sin result to bf16 before the store if the
        # consumer accepts bf16 positional embeddings (halves HBM write-back);
        # kept f32 for bit-parity with the PyTorch reference.
    )(embeds, inv_dim_t, phase)

    # (B, d_model, H*W) -> (B, d_model, H, W): contiguous reshape, free.
    return pos_flat.reshape(B, C, H, W)


def _reference(pixel_mask, d_model, temperature):
    """Pure-JAX transcription of the PyTorch forward (for verification)."""
    E = d_model // 2
    scale = 2.0 * math.pi
    eps = 1e-6
    m = pixel_mask.astype(jnp.float32)
    y_embed = jnp.cumsum(m, axis=1)
    x_embed = jnp.cumsum(m, axis=2)
    y_embed = y_embed / (y_embed[:, -1:, :] + eps) * scale
    x_embed = x_embed / (x_embed[:, :, -1:] + eps) * scale
    i = jnp.arange(E, dtype=jnp.float32)
    dim_t = jnp.power(jnp.float32(temperature),
                      2.0 * jnp.floor(i / 2.0) / float(E))
    pos_x = x_embed[:, :, :, None] / dim_t
    pos_y = y_embed[:, :, :, None] / dim_t
    pos_x = jnp.stack((jnp.sin(pos_x[..., 0::2]), jnp.cos(pos_x[..., 1::2])),
                      axis=4).reshape(*pos_x.shape[:3], -1)
    pos_y = jnp.stack((jnp.sin(pos_y[..., 0::2]), jnp.cos(pos_y[..., 1::2])),
                      axis=4).reshape(*pos_y.shape[:3], -1)
    pos = jnp.concatenate((pos_y, pos_x), axis=3)
    return jnp.transpose(pos, (0, 3, 1, 2))


if __name__ == "__main__":
    B, C, H, W = 2, 4, 16, 16
    d_model = 32
    temperature = 10000.0

    key = jax.random.PRNGKey(0)
    pixel_values = jax.random.normal(key, (B, C, H, W), dtype=jnp.float32)

    # Deterministic non-trivial mask: batch 0 fully valid, batch 1 partial.
    mask = jnp.ones((B, H, W), dtype=jnp.int32)
    mask = mask.at[1, 12:, :].set(0)
    mask = mask.at[1, :, 10:].set(0)

    pos = pyramid_sine_position_embedding(
        pixel_values, mask, d_model=d_model, temperature=temperature)
    pos = jax.block_until_ready(pos)

    ref = _reference(mask, d_model, temperature)
    assert pos.shape == (B, d_model, H, W)
    assert jnp.allclose(pos, ref, atol=1e-5, rtol=1e-5)

    print("KERNEL_OK")
</pallas_src>

<mosaic_0001>
module attributes {stable_mosaic.version = 11 : i64} {
  func.func @_pos_embed_kernel(%arg0: i32, %arg1: i32, %arg2: memref<1x2x256xf32, #tpu.memory_space<vmem>>, %arg3: memref<16x1xf32, #tpu.memory_space<vmem>>, %arg4: memref<16x1xf32, #tpu.memory_space<vmem>>, %arg5: memref<1x32x256xf32, #tpu.memory_space<vmem>>) attributes {dimension_semantics = [#tpu.dimension_semantics<parallel>, #tpu.dimension_semantics<parallel>], iteration_bounds = array<i64: 2, 1>, scalar_prefetch = 0 : i64, scratch_operands = 0 : i64, tpu.core_type = #tpu.core_type<tc>, window_params = [{transform_indices = @transform_0, window_bounds = array<i64: 1, 2, 256>}, {pipeline_mode = #tpu.pipeline_mode<synchronous>, transform_indices = @transform_1, window_bounds = array<i64: 16, 1>}, {pipeline_mode = #tpu.pipeline_mode<synchronous>, transform_indices = @transform_2, window_bounds = array<i64: 16, 1>}, {transform_indices = @transform_3, window_bounds = array<i64: 1, 32, 256>}]} {
    %c0 = arith.constant 0 : index
    %c0_0 = arith.constant 0 : index
    %0 = vector.load %arg3[%c0, %c0_0] : memref<16x1xf32, #tpu.memory_space<vmem>>, vector<16x1xf32>
    %c0_1 = arith.constant 0 : index
    %c0_2 = arith.constant 0 : index
    %1 = vector.load %arg4[%c0_1, %c0_2] : memref<16x1xf32, #tpu.memory_space<vmem>>, vector<16x1xf32>
    %c0_3 = arith.constant 0 : index
    %c0_4 = arith.constant 0 : index
    %c0_5 = arith.constant 0 : index
    %2 = vector.load %arg2[%c0_3, %c0_4, %c0_5] : memref<1x2x256xf32, #tpu.memory_space<vmem>>, vector<1x1x256xf32>
    %3 = vector.shape_cast %2 : vector<1x1x256xf32> to vector<1x256xf32>
    %c0_6 = arith.constant 0 : index
    %c1 = arith.constant 1 : index
    %c0_7 = arith.constant 0 : index
    %4 = vector.load %arg2[%c0_6, %c1, %c0_7] : memref<1x2x256xf32, #tpu.memory_space<vmem>>, vector<1x1x256xf32>
    %5 = vector.shape_cast %4 : vector<1x1x256xf32> to vector<1x256xf32>
    %6 = vector.broadcast %0 : vector<16x1xf32> to vector<16x256xf32>
    %7 = vector.broadcast %3 : vector<1x256xf32> to vector<16x256xf32>
    %8 = arith.mulf %6, %7 : vector<16x256xf32>
    %9 = vector.broadcast %1 : vector<16x1xf32> to vector<16x256xf32>
    %10 = arith.addf %8, %9 : vector<16x256xf32>
    %11 = math.sin %10 : vector<16x256xf32>
    %c0_8 = arith.constant 0 : index
    %c0_9 = arith.constant 0 : index
    %c0_10 = arith.constant 0 : index
    %12 = vector.load %arg5[%c0_8, %c0_9, %c0_10] : memref<1x32x256xf32, #tpu.memory_space<vmem>>, vector<1x16x256xf32>
    %13 = vector.shape_cast %12 : vector<1x16x256xf32> to vector<16x256xf32>
    %14 = vector.shape_cast %11 : vector<16x256xf32> to vector<1x16x256xf32>
    tpu.vector_store %arg5[%c0_8, %c0_9, %c0_10], %14 {strides = array<i32>} : memref<1x32x256xf32, #tpu.memory_space<vmem>>, vector<1x16x256xf32>,
    %15 = vector.broadcast %0 : vector<16x1xf32> to vector<16x256xf32>
    %16 = vector.broadcast %5 : vector<1x256xf32> to vector<16x256xf32>
    %17 = arith.mulf %15, %16 : vector<16x256xf32>
    %18 = vector.broadcast %1 : vector<16x1xf32> to vector<16x256xf32>
    %19 = arith.addf %17, %18 : vector<16x256xf32>
    %20 = math.sin %19 : vector<16x256xf32>
    %c0_11 = arith.constant 0 : index
    %c16 = arith.constant 16 : index
    %c0_12 = arith.constant 0 : index
    %21 = vector.load %arg5[%c0_11, %c16, %c0_12] : memref<1x32x256xf32, #tpu.memory_space<vmem>>, vector<1x16x256xf32>
    %22 = vector.shape_cast %21 : vector<1x16x256xf32> to vector<16x256xf32>
    %23 = vector.shape_cast %20 : vector<16x256xf32> to vector<1x16x256xf32>
    tpu.vector_store %arg5[%c0_11, %c16, %c0_12], %23 {strides = array<i32>} : memref<1x32x256xf32, #tpu.memory_space<vmem>>, vector<1x16x256xf32>,
    return
  }
  func.func @transform_0(%arg0: i32, %arg1: i32) -> (i32, i32, i32) {
    %c0_i32 = arith.constant 0 : i32
    %c0_i32_0 = arith.constant 0 : i32
    return %arg0, %c0_i32, %arg1 : i32, i32, i32
  }
  func.func @transform_1(%arg0: i32, %arg1: i32) -> (i32, i32) {
    %c0_i32 = arith.constant 0 : i32
    %c0_i32_0 = arith.constant 0 : i32
    %c0_i32_1 = arith.constant 0 : i32
    return %c0_i32, %c0_i32_0 : i32, i32
  }
  func.func @transform_2(%arg0: i32, %arg1: i32) -> (i32, i32) {
    %c0_i32 = arith.constant 0 : i32
    %c0_i32_0 = arith.constant 0 : i32
    %c0_i32_1 = arith.constant 0 : i32
    return %c0_i32, %c0_i32_0 : i32, i32
  }
  func.func @transform_3(%arg0: i32, %arg1: i32) -> (i32, i32, i32) {
    %c0_i32 = arith.constant 0 : i32
    %c0_i32_0 = arith.constant 0 : i32
    return %arg0, %c0_i32, %arg1 : i32, i32, i32
  }
}

</mosaic_0001>

<llo_original>
// kernel: tpu_custom_call.1
$region0: #{tpu_custom_call.1}
  #allocation0 [shape = 'u32[]', space=smem, size = 0x4, offset = 0x4, fixed_abs, tag = 'smem constant byte address 0x4 - core index']
  #allocation1 [shape = 'u32[144,128]{1,0:T(1,128)}', space=vmem, size = 0x12000, scoped, tag = 'internal scratch']
  %s0 = inlined_call_operand.vmem [shape: f32[2,2,256], index: 0, kind: input, shape index: {}]
  %s1 = inlined_call_operand.vmem [shape: f32[16,1], index: 1, kind: input, shape index: {}]
  %s2 = inlined_call_operand.vmem [shape: f32[16,1], index: 2, kind: input, shape index: {}]
  %s3 = inlined_call_operand.hbm [shape: f32[2,32,256], index: 3, kind: output, shape index: {}]
  %s4 = sld [smem:[#allocation0]]
  $region45: #{tpu_custom_call.1} parent=0
    _
  %s6 = ssub.s32 1, %s4
  %s7 = scalar_select 0, %s6, %s4
  $region1: #{tpu_custom_call.1} parent=0
    #allocation2 [shape = 'u8[65536]{0}', space=vmem, size = 0x10000, scoped, tag = 'output window, operand 0']
    #allocation3 [shape = 's32[2]{0}', space=sflag, size = 0x8, scoped, tag = 'scoped memory for tpu_custom_call.1']
    %8 = vsyncpa [#allocation3], 0
    %s9 = scalar_lea.sflag [#allocation3], 1
    %10 = vsyncpa %s9, 0
    loop: start=0, step=1, limit=4
    $region2: #{tpu_custom_call.1} parent=1 // loop_pre_header
      _
    $region3: #{tpu_custom_call.1} parent=1 // loop_header
      %s12 = sphi 0, %s16
      %p13 = scmp.ge.s32.totalorder %s12, 4
      %s19 = sphi 0, %s31
      %s20 = sphi 0, %s27
      %s21 = sphi 0, %s19
      %s22 = sphi 0, %s20
      %s23 = sphi 0, %s21
      %s24 = sphi 0, %s22
      %s36 = sphi 0, %s38
      %s39 = sphi 0, %s36
      %s40 = sphi 0, %s39
      %s56 = sphi 0, %s40
      %s60 = sphi 0, %s60
      %s62 = sphi 0, %s60
      %s63 = sphi 0, %s62
      %s77 = sphi 0, %s63
      %s81 = sphi 0, %s81
      %s83 = sphi 0, %s81
      %s84 = sphi 0, %s83
      %s98 = sphi 0, %s84
      %s106 = sphi 0, %s108
      %s109 = sphi 0, %s106
      %s110 = sphi 0, %s109
      %s126 = sphi 0, %s110
    $region4: #{tpu_custom_call.1} parent=1 // loop_header_branch
      %15 = sbr.rel (%p13) target = $region8
    $region5: #{tpu_custom_call.1} parent=1 // loop_body
      %s17 = ssub.s32 %s12, 1
      %s18 = ssub.s32 %s12, 2
      %s25 = sadd.s32 1, %s20
      %p26 = scmp.ge.s32.totalorder %s25, 1
      %s27 = scalar_select %p26, 0, %s25
      %s28 = sadd.s32 1, %s19
      %s29 = scalar_select %p26, %s28, %s19
      %p30 = scmp.ge.s32.totalorder %s29, 2
      %s31 = scalar_select %p30, 0, %s29
      %s32 = ssub.s32 %s19, %s31
      %s33 = ssub.s32 %s20, %s27
      %s34 = sor.u32 %s32, %s33
      %p35 = scmp.eq.s32.totalorder %s34, 0
      %s37 = sadd.s32 %s36, 1
      %s38 = scalar_select %p35, %s36, %s37
      %p41 = pneg %p35
      %p42 = scmp.eq.s32.totalorder %s12, 1
      %p43 = por %p41, %p42
      %p44 = scmp.ne.s32.totalorder %s36, %s39
      %p45 = scmp.eq.s32.totalorder %s12, 0
      %p46 = por %p44, %p45
      %p47 = scmp.ne.s32.totalorder %s36, %s39
      %p48 = scmp.eq.s32.totalorder %s17, 1
      %p49 = por %p47, %p48
      %p50 = scmp.ne.s32.totalorder %s39, %s40
      %p51 = scmp.eq.s32.totalorder %s17, 0
      %p52 = por %p50, %p51
      %p53 = scmp.ne.s32.totalorder %s39, %s40
      %p54 = scmp.eq.s32.totalorder %s18, 1
      %p55 = por %p53, %p54
      %p57 = scmp.ne.s32.totalorder %s40, %s56
      %p58 = scmp.eq.s32.totalorder %s18, 0
      %p59 = por %p57, %p58
      %s61 = sadd.s32 %s60, 1
      %p64 = scmp.eq.s32.totalorder %s12, 1
      %p65 = scmp.ne.s32.totalorder %s60, %s62
      %p66 = scmp.eq.s32.totalorder %s12, 0
      %p67 = por %p65, %p66
      %p68 = scmp.ne.s32.totalorder %s60, %s62
      %p69 = scmp.eq.s32.totalorder %s17, 1
      %p70 = por %p68, %p69
      %p71 = scmp.ne.s32.totalorder %s62, %s63
      %p72 = scmp.eq.s32.totalorder %s17, 0
      %p73 = por %p71, %p72
      %p74 = scmp.ne.s32.totalorder %s62, %s63
      %p75 = scmp.eq.s32.totalorder %s18, 1
      %p76 = por %p74, %p75
      %p78 = scmp.ne.s32.totalorder %s63, %s77
      %p79 = scmp.eq.s32.totalorder %s18, 0
      %p80 = por %p78, %p79
      %s82 = sadd.s32 %s81, 1
      %p85 = scmp.eq.s32.totalorder %s12, 1
      %p86 = scmp.ne.s32.totalorder %s81, %s83
      %p87 = scmp.eq.s32.totalorder %s12, 0
      %p88 = por %p86, %p87
      %p89 = scmp.ne.s32.totalorder %s81, %s83
      %p90 = scmp.eq.s32.totalorder %s17, 1
      %p91 = por %p89, %p90
      %p92 = scmp.ne.s32.totalorder %s83, %s84
      %p93 = scmp.eq.s32.totalorder %s17, 0
      %p94 = por %p92, %p93
      %p95 = scmp.ne.s32.totalorder %s83, %s84
      %p96 = scmp.eq.s32.totalorder %s18, 1
      %p97 = por %p95, %p96
      %p99 = scmp.ne.s32.totalorder %s84, %s98
      %p100 = scmp.eq.s32.totalorder %s18, 0
      %p101 = por %p99, %p100
      %s102 = ssub.s32 %s19, %s31
      %s103 = ssub.s32 %s20, %s27
      %s104 = sor.u32 %s102, %s103
      %p105 = scmp.eq.s32.totalorder %s104, 0
      %s107 = sadd.s32 %s106, 1
      %s108 = scalar_select %p105, %s106, %s107
      %p111 = pneg %p105
      %p112 = scmp.eq.s32.totalorder %s12, 1
      %p113 = por %p111, %p112
      %p114 = scmp.ne.s32.totalorder %s106, %s109
      %p115 = scmp.eq.s32.totalorder %s12, 0
      %p116 = por %p114, %p115
      %p117 = scmp.ne.s32.totalorder %s106, %s109
      %p118 = scmp.eq.s32.totalorder %s17, 1
      %p119 = por %p117, %p118
      %p120 = scmp.ne.s32.totalorder %s109, %s110
      %p121 = scmp.eq.s32.totalorder %s17, 0
      %p122 = por %p120, %p121
      %p123 = scmp.ne.s32.totalorder %s109, %s110
      %p124 = scmp.eq.s32.totalorder %s18, 1
      %p125 = por %p123, %p124
      %p127 = scmp.ne.s32.totalorder %s110, %s126
      %p128 = scmp.eq.s32.totalorder %s18, 0
      %p129 = por %p127, %p128
      %p130 = scmp.le.s32.totalorder 1, %s12
      %p131 = scmp.lt.s32.totalorder %s12, 3
      %p132 = pnand %p130, %p131
      %p133 = pneg %p132
      // Predicated region
      $region9: #{tpu_custom_call.1} parent=5 // pred_check
        _
      $region10: #{tpu_custom_call.1} parent=5 // pred_check_branch
        %135 = sbr.rel (%p132) target = $region12
      $region11: #{tpu_custom_call.1} parent=5 // pred_region
        %s136 = ssub.s32 %s12, 1
        // Predicated region
        $region13: #{tpu_custom_call.1} parent=11 // pred_check
          %p137 = pneg %p73
        $region14: #{tpu_custom_call.1} parent=11 // pred_check_branch
          %139 = sbr.rel (%p137) target = $region16
        $region15: #{tpu_custom_call.1} parent=11 // pred_region
          _
        $region16: #{tpu_custom_call.1} parent=11 // pred_fallthru
          _
        // Predicated region
        $region17: #{tpu_custom_call.1} parent=11 // pred_check
          %p140 = pneg %p94
        $region18: #{tpu_custom_call.1} parent=11 // pred_check_branch
          %142 = sbr.rel (%p140) target = $region20
        $region19: #{tpu_custom_call.1} parent=11 // pred_region
          _
        $region20: #{tpu_custom_call.1} parent=11 // pred_fallthru
          _
      $region12: #{tpu_custom_call.1} parent=5 // pred_fallthru
        _
      %p143 = scmp.lt.s32.totalorder %s12, 2
      // Predicated region
      $region21: #{tpu_custom_call.1} parent=5 // pred_check
        %p144 = pneg %p143
      $region22: #{tpu_custom_call.1} parent=5 // pred_check_branch
        %146 = sbr.rel (%p144) target = $region24
      $region23: #{tpu_custom_call.1} parent=5 // pred_region
        // Predicated region
        $region25: #{tpu_custom_call.1} parent=23 // pred_check
          %p147 = pneg %p46
        $region26: #{tpu_custom_call.1} parent=23 // pred_check_branch
          %149 = sbr.rel (%p147) target = $region28
        $region27: #{tpu_custom_call.1} parent=23 // pred_region
          %s150 = smul.u32 2, %s20
          %p151 = scmp.lt.s32.totalorder %s19, 1
          %s152 = scalar_select %p151, %s19, 1
          %p153 = scmp.lt.s32.totalorder %s150, 1
          %s154 = scalar_select %p153, %s150, 1
          %s155 = smul.addr %s152, 2
          %s156 = sadd.s32 %s154, %s155
          %s157 = smul.addr %s156, 2
          %s158 = scalar_lea.vmem %s0, %s157
          %s159 = smul.u32 2, %s20
        $region28: #{tpu_custom_call.1} parent=23 // pred_fallthru
          _
      $region24: #{tpu_custom_call.1} parent=5 // pred_fallthru
        _
      %p160 = scmp.le.s32.totalorder 1, %s12
      %p161 = scmp.lt.s32.totalorder %s12, 3
      %p162 = pnand %p160, %p161
      %p163 = pneg %p162
      // Predicated region
      $region29: #{tpu_custom_call.1} parent=5 // pred_check
        _
      $region30: #{tpu_custom_call.1} parent=5 // pred_check_branch
        %165 = sbr.rel (%p162) target = $region32
      $region31: #{tpu_custom_call.1} parent=5 // pred_region
        %s166 = ssub.s32 %s12, 1
        %s167 = smul.u32 2, %s22
        %p168 = scmp.lt.s32.totalorder %s21, 1
        %s169 = scalar_select %p168, %s21, 1
        %p170 = scmp.lt.s32.totalorder %s167, 1
        %s171 = scalar_select %p170, %s167, 1
        %s172 = smul.addr %s169, 2
        %s173 = sadd.s32 %s171, %s172
        %s174 = smul.addr %s173, 2
        %s175 = scalar_lea.vmem %s0, %s174
        %p176 = pneg %p52
        %p177 = pneg %p49
        %p178 = pneg %p73
        %p179 = pneg %p70
        %p180 = pneg %p94
        %p181 = pneg %p91
        %p182 = pneg %p122
        %p183 = pneg %p119
        %s184 = sand.u32 %s109, 1
        %s185 = scalar_lea.sflag [#allocation3], %s184
        %s186 = sand.u32 %s109, 1
        %s187 = smul.addr %s186, 64
        %s188 = scalar_lea.vmem [#allocation2], %s187
        %s189 = smul.u32 2, %s22
        %p190 = scmp.lt.s32.totalorder %s21, 1
        %s191 = scalar_select %p190, %s21, 1
        %p192 = scmp.lt.s32.totalorder %s189, 1
        %s193 = scalar_select %p192, %s189, 1
        %s194 = smul.addr %s191, 2
        %s195 = sadd.s32 %s193, %s194
        %s196 = smul.addr %s195, 2
        %s197 = scalar_lea.vmem %s0, %s196
        %s198 = smul.u32 2, %s22
        %s199 = smul.u32 2, %s22
        %v200 = vld [vmem:[%s1] sm:$0xff]
        %v201 = vld [vmem:[%s1 + $0x8] sm:$0xff]
        %v202 = vld [vmem:[%s2] sm:$0xff]
        %v203 = vld [vmem:[%s2 + $0x8] sm:$0xff]
        %v204 = vld [vmem:[%s197] ss:$2 sm:$0x3]
        %s205 = scalar_lea.vmem %s197, 1
        %v206 = vld [vmem:[%s205] ss:$2 sm:$0x3]
        %208 = vset.pattern.permute.xlu0 0
        %209 = vperm.xlu0 %208, %v200
        %v210 = vpop.permute.xlu0 %209
        %213 = vset.pattern.permute.xlu0 0
        %214 = vperm.xlu0 %213, %v201
        %v215 = vpop.permute.xlu0 %214
        %v218 = vlaneseq
        %v219 = vshrl.u32 %v218, 7
        %v220 = vsub.s32 0, %v219
        %v221 = vrot.slane %v204, %v220
        %v222 = vlaneseq
        %v223 = vshrl.u32 %v222, 7
        %v224 = vsub.s32 1, %v223
        %v225 = vrot.slane %v204, %v224
        %v228 = vmul.f32 %v210, %v221
        %v229 = vmul.f32 %v210, %v225
        %v230 = vmul.f32 %v215, %v221
        %v231 = vmul.f32 %v215, %v225
        %233 = vset.pattern.permute.xlu0 0
        %234 = vperm.xlu0 %233, %v202
        %v235 = vpop.permute.xlu0 %234
        %238 = vset.pattern.permute.xlu0 0
        %239 = vperm.xlu0 %238, %v203
        %v240 = vpop.permute.xlu0 %239
        %v242 = vadd.f32 %v228, %v235
        %v243 = vadd.f32 %v229, %v235
        %v244 = vadd.f32 %v230, %v240
        %v245 = vadd.f32 %v231, %v240
        %v246 = vand.u32 2147483647, %v242
        %vm247 = vcmp.le.f32.partialorder %v246, 0.7853982
        %vm248 = vcmp.lt.s32.totalorder %v242, 0
        %v249 = vand.u32 %v242, 2139095040
        %v250 = vshrl.u32 %v249, 23
        %v251 = vsub.s32 %v250, 127
        %v252 = vand.u32 2147483647, %v242
        %v253 = vand.u32 %v252, 8388607
        %v254 = vor.u32 %v253, 8388608
        %v255 = vsub.s32 0, %v254
        %v256 = vadd.s32 %v251, 1
        %vm257 = vcmp.gt.s32.totalorder %v256, 0
        %v258 = vsel %vm257, %v256, 0
        %v259 = vshrl.u32 %v258, 5
        %v260 = vand.u32 %v258, 31
        %v261 = vsub.s32 32, %v260
        %v262 = vshrl.u32 683565275, %v261
        %v263 = vshll.u32 683565275, %v260
        %v264 = vshrl.u32 2475754826, %v261
        %v265 = vor.u32 %v263, %v264
        %v266 = vshll.u32 2475754826, %v260
        %v267 = vshrl.u32 2131351028, %v261
        %v268 = vor.u32 %v266, %v267
        %v269 = vshll.u32 2131351028, %v260
        %v270 = vshrl.u32 2102212464, %v261
        %v271 = vor.u32 %v269, %v270
        %v272 = vshll.u32 2102212464, %v260
        %v273 = vshrl.u32 920167782, %v261
        %v274 = vor.u32 %v272, %v273
        %v275 = vshll.u32 920167782, %v260
        %v276 = vshrl.u32 1326507024, %v261
        %v277 = vor.u32 %v275, %v276
        %vm278 = vcmp.lt.s32.totalorder %v259, 1
        %vm279 = vcmp.lt.s32.totalorder %v259, 2
        %vm280 = vcmp.lt.s32.totalorder %v259, 3
        %vm281 = vcmp.lt.s32.totalorder %v259, 4
        %v282 = vsel %vm278, %v262, %v265
        %v283 = vsel %vm281, %v271, 2102212464
        %v284 = vsel %vm280, %v268, %v283
        %v285 = vsel %vm279, %v282, %v284
        %v286 = vsel %vm278, %v265, %v268
        %v287 = vsel %vm281, %v274, 920167782
        %v288 = vsel %vm280, %v271, %v287
        %v289 = vsel %vm279, %v286, %v288
        %v290 = vsel %vm278, %v268, %v271
        %v291 = vsel %vm281, %v277, 1326507024
        %v292 = vsel %vm280, %v274, %v291
        %v293 = vsel %vm279, %v290, %v292
        %v294 = vshll.u32 %v254, 8
        %v295 = vmul.u32.u64.compose %v294, %v293
        %v296 = vextract.low.u32 %v295
        %v297 = vextract.high.u32 %v295
        %v298 = vmul.u32.u64.compose %v294, %v289
        %v299 = vextract.low.u32 %v298
        %v300 = vextract.high.u32 %v298
        %v301 = vmul.u32 %v294, %v285
        %v302 = vadd.s32 %v297, %v299
        %vm303 = vc.u32 %v297, %v299
        %v304 = vadd.s32 %v300, 1
        %v305 = vsel %vm303, %v304, %v300
        %v306 = vadd.s32 %v301, %v305
        %v307 = vadd.s32 %v306, 536870912
        %v308 = vshrl.u32 %v307, 30
        %v309 = vshll.u32 %v308, 30
        %v310 = vsub.s32 %v306, %v309
        %vm311 = vcmp.lt.s32.totalorder %v310, 0
        %v312 = vsub.s32 0, %v310
        %v313 = vsel %vm311, %v312, %v310
        %v314 = vclz %v313
        %v315 = vsub.s32 %v314, 2
        %vm316 = vcmp.gt.s32.totalorder 0, %v315
        %v317 = vsel %vm316, 0, %v315
        %v318 = vsub.s32 32, %v317
        %v319 = vshll.u32 %v310, %v317
        %v320 = vshrl.u32 %v302, %v318
        %v321 = vor.u32 %v319, %v320
        %v322 = vsub.s32 4294967266, %v317
        %v323 = vadd.s32 %v322, 127
        %v324 = vshll.u32 %v323, 23
        %v325 = vor.u32 4788187, %v324
        %v326 = vand.u32 2147483647, %v325
        %v328 = vcvt.s32.f32 %v321
        %v329 = vmul.f32 %v328, %v326
        %v330 = vxor.u32 %v329, 2147483648
        %v331 = vsel %vm248, %v330, %v329
        %v332 = vsub.s32 4, %v308
        %v333 = vsel %vm248, %v332, %v308
        %v334 = vsel %vm247, %v242, %v331
        %v335 = vsel %vm247, 0, %v333
        %v336 = vcosq.f32.pop %v334
        %v337 = vsinq.f32.pop %v334
        %vm338 = vweird.f32 %v242
        %v339 = vadd.s32 %v335, 3
        %v340 = vand.u32 %v339, 3
        %vm341 = vcmp.lt.s32.totalorder %v340, 2
        %vm342 = vcmp.eq.s32.totalorder %v340, 0
        %v343 = vxor.u32 %v337, 2147483648
        %v344 = vsel %vm342, %v336, %v343
        %vm345 = vcmp.eq.s32.totalorder %v340, 2
        %v346 = vxor.u32 %v336, 2147483648
        %v347 = vsel %vm345, %v346, %v337
        %v348 = vsel %vm341, %v344, %v347
        %v349 = vsel %vm338, nan, %v348
        %v350 = vand.u32 2147483647, %v243
        %vm351 = vcmp.le.f32.partialorder %v350, 0.7853982
        %vm352 = vcmp.lt.s32.totalorder %v243, 0
        %v353 = vand.u32 %v243, 2139095040
        %v354 = vshrl.u32 %v353, 23
        %v355 = vsub.s32 %v354, 127
        %v356 = vand.u32 2147483647, %v243
        %v357 = vand.u32 %v356, 8388607
        %v358 = vor.u32 %v357, 8388608
        %v359 = vsub.s32 0, %v358
        %v360 = vadd.s32 %v355, 1
        %vm361 = vcmp.gt.s32.totalorder %v360, 0
        %v362 = vsel %vm361, %v360, 0
        %v363 = vshrl.u32 %v362, 5
        %v364 = vand.u32 %v362, 31
        %v365 = vsub.s32 32, %v364
        %v366 = vshrl.u32 683565275, %v365
        %v367 = vshll.u32 683565275, %v364
        %v368 = vshrl.u32 2475754826, %v365
        %v369 = vor.u32 %v367, %v368
        %v370 = vshll.u32 2475754826, %v364
        %v371 = vshrl.u32 2131351028, %v365
        %v372 = vor.u32 %v370, %v371
        %v373 = vshll.u32 2131351028, %v364
        %v374 = vshrl.u32 2102212464, %v365
        %v375 = vor.u32 %v373, %v374
        %v376 = vshll.u32 2102212464, %v364
        %v377 = vshrl.u32 920167782, %v365
        %v378 = vor.u32 %v376, %v377
        %v379 = vshll.u32 920167782, %v364
        %v380 = vshrl.u32 1326507024, %v365
        %v381 = vor.u32 %v379, %v380
        %vm382 = vcmp.lt.s32.totalorder %v363, 1
        %vm383 = vcmp.lt.s32.totalorder %v363, 2
        %vm384 = vcmp.lt.s32.totalorder %v363, 3
        %vm385 = vcmp.lt.s32.totalorder %v363, 4
        %v386 = vsel %vm382, %v366, %v369
        %v387 = vsel %vm385, %v375, 2102212464
        %v388 = vsel %vm384, %v372, %v387
        %v389 = vsel %vm383, %v386, %v388
        %v390 = vsel %vm382, %v369, %v372
        %v391 = vsel %vm385, %v378, 920167782
        %v392 = vsel %vm384, %v375, %v391
        %v393 = vsel %vm383, %v390, %v392
        %v394 = vsel %vm382, %v372, %v375
        %v395 = vsel %vm385, %v381, 1326507024
        %v396 = vsel %vm384, %v378, %v395
        %v397 = vsel %vm383, %v394, %v396
        %v398 = vshll.u32 %v358, 8
        %v399 = vmul.u32.u64.compose %v398, %v397
        %v400 = vextract.low.u32 %v399
        %v401 = vextract.high.u32 %v399
        %v402 = vmul.u32.u64.compose %v398, %v393
        %v403 = vextract.low.u32 %v402
        %v404 = vextract.high.u32 %v402
        %v405 = vmul.u32 %v398, %v389
        %v406 = vadd.s32 %v401, %v403
        %vm407 = vc.u32 %v401, %v403
        %v408 = vadd.s32 %v404, 1
        %v409 = vsel %vm407, %v408, %v404
        %v410 = vadd.s32 %v405, %v409
        %v411 = vadd.s32 %v410, 536870912
        %v412 = vshrl.u32 %v411, 30
        %v413 = vshll.u32 %v412, 30
        %v414 = vsub.s32 %v410, %v413
        %vm415 = vcmp.lt.s32.totalorder %v414, 0
        %v416 = vsub.s32 0, %v414
        %v417 = vsel %vm415, %v416, %v414
        %v418 = vclz %v417
        %v419 = vsub.s32 %v418, 2
        %vm420 = vcmp.gt.s32.totalorder 0, %v419
        %v421 = vsel %vm420, 0, %v419
        %v422 = vsub.s32 32, %v421
        %v423 = vshll.u32 %v414, %v421
        %v424 = vshrl.u32 %v406, %v422
        %v425 = vor.u32 %v423, %v424
        %v426 = vsub.s32 4294967266, %v421
        %v427 = vadd.s32 %v426, 127
        %v428 = vshll.u32 %v427, 23
        %v429 = vor.u32 4788187, %v428
        %v430 = vand.u32 2147483647, %v429
        %v432 = vcvt.s32.f32 %v425
        %v433 = vmul.f32 %v432, %v430
        %v434 = vxor.u32 %v433, 2147483648
        %v435 = vsel %vm352, %v434, %v433
        %v436 = vsub.s32 4, %v412
        %v437 = vsel %vm352, %v436, %v412
        %v438 = vsel %vm351, %v243, %v435
        %v439 = vsel %vm351, 0, %v437
        %v440 = vcosq.f32.pop %v438
        %v441 = vsinq.f32.pop %v438
        %vm442 = vweird.f32 %v243
        %v443 = vadd.s32 %v439, 3
        %v444 = vand.u32 %v443, 3
        %vm445 = vcmp.lt.s32.totalorder %v444, 2
        %vm446 = vcmp.eq.s32.totalorder %v444, 0
        %v447 = vxor.u32 %v441, 2147483648
        %v448 = vsel %vm446, %v440, %v447
        %vm449 = vcmp.eq.s32.totalorder %v444, 2
        %v450 = vxor.u32 %v440, 2147483648
        %v451 = vsel %vm449, %v450, %v441
        %v452 = vsel %vm445, %v448, %v451
        %v453 = vsel %vm442, nan, %v452
        %v454 = vand.u32 2147483647, %v244
        %vm455 = vcmp.le.f32.partialorder %v454, 0.7853982
        %vm456 = vcmp.lt.s32.totalorder %v244, 0
        %v457 = vand.u32 %v244, 2139095040
        %v458 = vshrl.u32 %v457, 23
        %v459 = vsub.s32 %v458, 127
        %v460 = vand.u32 2147483647, %v244
        %v461 = vand.u32 %v460, 8388607
        %v462 = vor.u32 %v461, 8388608
        %v463 = vsub.s32 0, %v462
        %v464 = vadd.s32 %v459, 1
        %vm465 = vcmp.gt.s32.totalorder %v464, 0
        %v466 = vsel %vm465, %v464, 0
        %v467 = vshrl.u32 %v466, 5
        %v468 = vand.u32 %v466, 31
        %v469 = vsub.s32 32, %v468
        %v470 = vshrl.u32 683565275, %v469
        %v471 = vshll.u32 683565275, %v468
        %v472 = vshrl.u32 2475754826, %v469
        %v473 = vor.u32 %v471, %v472
        %v474 = vshll.u32 2475754826, %v468
        %v475 = vshrl.u32 2131351028, %v469
        %v476 = vor.u32 %v474, %v475
        %v477 = vshll.u32 2131351028, %v468
        %v478 = vshrl.u32 2102212464, %v469
        %v479 = vor.u32 %v477, %v478
        %v480 = vshll.u32 2102212464, %v468
        %v481 = vshrl.u32 920167782, %v469
        %v482 = vor.u32 %v480, %v481
        %v483 = vshll.u32 920167782, %v468
        %v484 = vshrl.u32 1326507024, %v469
        %v485 = vor.u32 %v483, %v484
        %vm486 = vcmp.lt.s32.totalorder %v467, 1
        %vm487 = vcmp.lt.s32.totalorder %v467, 2
        %vm488 = vcmp.lt.s32.totalorder %v467, 3
        %vm489 = vcmp.lt.s32.totalorder %v467, 4
        %v490 = vsel %vm486, %v470, %v473
        %v491 = vsel %vm489, %v479, 2102212464
        %v492 = vsel %vm488, %v476, %v491
        %v493 = vsel %vm487, %v490, %v492
        %v494 = vsel %vm486, %v473, %v476
        %v495 = vsel %vm489, %v482, 920167782
        %v496 = vsel %vm488, %v479, %v495
        %v497 = vsel %vm487, %v494, %v496
        %v498 = vsel %vm486, %v476, %v479
        %v499 = vsel %vm489, %v485, 1326507024
        %v500 = vsel %vm488, %v482, %v499
        %v501 = vsel %vm487, %v498, %v500
        %v502 = vshll.u32 %v462, 8
        %v503 = vmul.u32.u64.compose %v502, %v501
        %v504 = vextract.low.u32 %v503
        %v505 = vextract.high.u32 %v503
        %v506 = vmul.u32.u64.compose %v502, %v497
        %v507 = vextract.low.u32 %v506
        %v508 = vextract.high.u32 %v506
        %v509 = vmul.u32 %v502, %v493
        %v510 = vadd.s32 %v505, %v507
        %vm511 = vc.u32 %v505, %v507
        %v512 = vadd.s32 %v508, 1
        %v513 = vsel %vm511, %v512, %v508
        %v514 = vadd.s32 %v509, %v513
        %v515 = vadd.s32 %v514, 536870912
        %v516 = vshrl.u32 %v515, 30
        %v517 = vshll.u32 %v516, 30
        %v518 = vsub.s32 %v514, %v517
        %vm519 = vcmp.lt.s32.totalorder %v518, 0
        %v520 = vsub.s32 0, %v518
        %v521 = vsel %vm519, %v520, %v518
        %v522 = vclz %v521
        %v523 = vsub.s32 %v522, 2
        %vm524 = vcmp.gt.s32.totalorder 0, %v523
        %v525 = vsel %vm524, 0, %v523
        %v526 = vsub.s32 32, %v525
        %v527 = vshll.u32 %v518, %v525
        %v528 = vshrl.u32 %v510, %v526
        %v529 = vor.u32 %v527, %v528
        %v530 = vsub.s32 4294967266, %v525
        %v531 = vadd.s32 %v530, 127
        %v532 = vshll.u32 %v531, 23
        %v533 = vor.u32 4788187, %v532
        %v534 = vand.u32 2147483647, %v533
        %v536 = vcvt.s32.f32 %v529
        %v537 = vmul.f32 %v536, %v534
        %v538 = vxor.u32 %v537, 2147483648
        %v539 = vsel %vm456, %v538, %v537
        %v540 = vsub.s32 4, %v516
        %v541 = vsel %vm456, %v540, %v516
        %v542 = vsel %vm455, %v244, %v539
        %v543 = vsel %vm455, 0, %v541
        %v544 = vcosq.f32.pop %v542
        %v545 = vsinq.f32.pop %v542
        %vm546 = vweird.f32 %v244
        %v547 = vadd.s32 %v543, 3
        %v548 = vand.u32 %v547, 3
        %vm549 = vcmp.lt.s32.totalorder %v548, 2
        %vm550 = vcmp.eq.s32.totalorder %v548, 0
        %v551 = vxor.u32 %v545, 2147483648
        %v552 = vsel %vm550, %v544, %v551
        %vm553 = vcmp.eq.s32.totalorder %v548, 2
        %v554 = vxor.u32 %v544, 2147483648
        %v555 = vsel %vm553, %v554, %v545
        %v556 = vsel %vm549, %v552, %v555
        %v557 = vsel %vm546, nan, %v556
        %v558 = vand.u32 2147483647, %v245
        %vm559 = vcmp.le.f32.partialorder %v558, 0.7853982
        %vm560 = vcmp.lt.s32.totalorder %v245, 0
        %v561 = vand.u32 %v245, 2139095040
        %v562 = vshrl.u32 %v561, 23
        %v563 = vsub.s32 %v562, 127
        %v564 = vand.u32 2147483647, %v245
        %v565 = vand.u32 %v564, 8388607
        %v566 = vor.u32 %v565, 8388608
        %v567 = vsub.s32 0, %v566
        %v568 = vadd.s32 %v563, 1
        %vm569 = vcmp.gt.s32.totalorder %v568, 0
        %v570 = vsel %vm569, %v568, 0
        %v571 = vshrl.u32 %v570, 5
        %v572 = vand.u32 %v570, 31
        %v573 = vsub.s32 32, %v572
        %v574 = vshrl.u32 683565275, %v573
        %v575 = vshll.u32 683565275, %v572
        %v576 = vshrl.u32 2475754826, %v573
        %v577 = vor.u32 %v575, %v576
        %v578 = vshll.u32 2475754826, %v572
        %v579 = vshrl.u32 2131351028, %v573
        %v580 = vor.u32 %v578, %v579
        %v581 = vshll.u32 2131351028, %v572
        %v582 = vshrl.u32 2102212464, %v573
        %v583 = vor.u32 %v581, %v582
        %v584 = vshll.u32 2102212464, %v572
        %v585 = vshrl.u32 920167782, %v573
        %v586 = vor.u32 %v584, %v585
        %v587 = vshll.u32 920167782, %v572
        %v588 = vshrl.u32 1326507024, %v573
        %v589 = vor.u32 %v587, %v588
        %vm590 = vcmp.lt.s32.totalorder %v571, 1
        %vm591 = vcmp.lt.s32.totalorder %v571, 2
        %vm592 = vcmp.lt.s32.totalorder %v571, 3
        %vm593 = vcmp.lt.s32.totalorder %v571, 4
        %v594 = vsel %vm590, %v574, %v577
        %v595 = vsel %vm593, %v583, 2102212464
        %v596 = vsel %vm592, %v580, %v595
        %v597 = vsel %vm591, %v594, %v596
        %v598 = vsel %vm590, %v577, %v580
        %v599 = vsel %vm593, %v586, 920167782
        %v600 = vsel %vm592, %v583, %v599
        %v601 = vsel %vm591, %v598, %v600
        %v602 = vsel %vm590, %v580, %v583
        %v603 = vsel %vm593, %v589, 1326507024
        %v604 = vsel %vm592, %v586, %v603
        %v605 = vsel %vm591, %v602, %v604
        %v606 = vshll.u32 %v566, 8
        %v607 = vmul.u32.u64.compose %v606, %v605
        %v608 = vextract.low.u32 %v607
        %v609 = vextract.high.u32 %v607
        %v610 = vmul.u32.u64.compose %v606, %v601
        %v611 = vextract.low.u32 %v610
        %v612 = vextract.high.u32 %v610
        %v613 = vmul.u32 %v606, %v597
        %v614 = vadd.s32 %v609, %v611
        %vm615 = vc.u32 %v609, %v611
        %v616 = vadd.s32 %v612, 1
        %v617 = vsel %vm615, %v616, %v612
        %v618 = vadd.s32 %v613, %v617
        %v619 = vadd.s32 %v618, 536870912
        %v620 = vshrl.u32 %v619, 30
        %v621 = vshll.u32 %v620, 30
        %v622 = vsub.s32 %v618, %v621
        %vm623 = vcmp.lt.s32.totalorder %v622, 0
        %v624 = vsub.s32 0, %v622
        %v625 = vsel %vm623, %v624, %v622
        %v626 = vclz %v625
        %v627 = vsub.s32 %v626, 2
        %vm628 = vcmp.gt.s32.totalorder 0, %v627
        %v629 = vsel %vm628, 0, %v627
        %v630 = vsub.s32 32, %v629
        %v631 = vshll.u32 %v622, %v629
        %v632 = vshrl.u32 %v614, %v630
        %v633 = vor.u32 %v631, %v632
        %v634 = vsub.s32 4294967266, %v629
        %v635 = vadd.s32 %v634, 127
        %v636 = vshll.u32 %v635, 23
        %v637 = vor.u32 4788187, %v636
        %v638 = vand.u32 2147483647, %v637
        %v640 = vcvt.s32.f32 %v633
        %v641 = vmul.f32 %v640, %v638
        %v642 = vxor.u32 %v641, 2147483648
        %v643 = vsel %vm560, %v642, %v641
        %v644 = vsub.s32 4, %v620
        %v645 = vsel %vm560, %v644, %v620
        %v646 = vsel %vm559, %v245, %v643
        %v647 = vsel %vm559, 0, %v645
        %v648 = vcosq.f32.pop %v646
        %v649 = vsinq.f32.pop %v646
        %vm650 = vweird.f32 %v245
        %v651 = vadd.s32 %v647, 3
        %v652 = vand.u32 %v651, 3
        %vm653 = vcmp.lt.s32.totalorder %v652, 2
        %vm654 = vcmp.eq.s32.totalorder %v652, 0
        %v655 = vxor.u32 %v649, 2147483648
        %v656 = vsel %vm654, %v648, %v655
        %vm657 = vcmp.eq.s32.totalorder %v652, 2
        %v658 = vxor.u32 %v648, 2147483648
        %v659 = vsel %vm657, %v658, %v649
        %v660 = vsel %vm653, %v656, %v659
        %v661 = vsel %vm650, nan, %v660
        %662 = vst [vmem:[%s188] sm:$0xff] %v349
        %663 = vst [vmem:[%s188 + $0x8] sm:$0xff] %v453
        %664 = vst [vmem:[%s188 + $0x10] sm:$0xff] %v557
        %665 = vst [vmem:[%s188 + $0x18] sm:$0xff] %v661
        %v667 = vlaneseq
        %v668 = vshrl.u32 %v667, 7
        %v669 = vsub.s32 0, %v668
        %v670 = vrot.slane %v206, %v669
        %v671 = vlaneseq
        %v672 = vshrl.u32 %v671, 7
        %v673 = vsub.s32 1, %v672
        %v674 = vrot.slane %v206, %v673
        %v677 = vmul.f32 %v210, %v670
        %v678 = vmul.f32 %v210, %v674
        %v679 = vmul.f32 %v215, %v670
        %v680 = vmul.f32 %v215, %v674
        %v681 = vadd.f32 %v677, %v235
        %v682 = vadd.f32 %v678, %v235
        %v683 = vadd.f32 %v679, %v240
        %v684 = vadd.f32 %v680, %v240
        %v685 = vand.u32 2147483647, %v681
        %vm686 = vcmp.le.f32.partialorder %v685, 0.7853982
        %vm687 = vcmp.lt.s32.totalorder %v681, 0
        %v688 = vand.u32 %v681, 2139095040
        %v689 = vshrl.u32 %v688, 23
        %v690 = vsub.s32 %v689, 127
        %v691 = vand.u32 2147483647, %v681
        %v692 = vand.u32 %v691, 8388607
        %v693 = vor.u32 %v692, 8388608
        %v694 = vsub.s32 0, %v693
        %v695 = vadd.s32 %v690, 1
        %vm696 = vcmp.gt.s32.totalorder %v695, 0
        %v697 = vsel %vm696, %v695, 0
        %v698 = vshrl.u32 %v697, 5
        %v699 = vand.u32 %v697, 31
        %v700 = vsub.s32 32, %v699
        %v701 = vshrl.u32 683565275, %v700
        %v702 = vshll.u32 683565275, %v699
        %v703 = vshrl.u32 2475754826, %v700
        %v704 = vor.u32 %v702, %v703
        %v705 = vshll.u32 2475754826, %v699
        %v706 = vshrl.u32 2131351028, %v700
        %v707 = vor.u32 %v705, %v706
        %v708 = vshll.u32 2131351028, %v699
        %v709 = vshrl.u32 2102212464, %v700
        %v710 = vor.u32 %v708, %v709
        %v711 = vshll.u32 2102212464, %v699
        %v712 = vshrl.u32 920167782, %v700
        %v713 = vor.u32 %v711, %v712
        %v714 = vshll.u32 920167782, %v699
        %v715 = vshrl.u32 1326507024, %v700
        %v716 = vor.u32 %v714, %v715
        %vm717 = vcmp.lt.s32.totalorder %v698, 1
        %vm718 = vcmp.lt.s32.totalorder %v698, 2
        %vm719 = vcmp.lt.s32.totalorder %v698, 3
        %vm720 = vcmp.lt.s32.totalorder %v698, 4
        %v721 = vsel %vm717, %v701, %v704
        %v722 = vsel %vm720, %v710, 2102212464
        %v723 = vsel %vm719, %v707, %v722
        %v724 = vsel %vm718, %v721, %v723
        %v725 = vsel %vm717, %v704, %v707
        %v726 = vsel %vm720, %v713, 920167782
        %v727 = vsel %vm719, %v710, %v726
        %v728 = vsel %vm718, %v725, %v727
        %v729 = vsel %vm717, %v707, %v710
        %v730 = vsel %vm720, %v716, 1326507024
        %v731 = vsel %vm719, %v713, %v730
        %v732 = vsel %vm718, %v729, %v731
        %v733 = vshll.u32 %v693, 8
        %v734 = vmul.u32.u64.compose %v733, %v732
        %v735 = vextract.low.u32 %v734
        %v736 = vextract.high.u32 %v734
        %v737 = vmul.u32.u64.compose %v733, %v728
        %v738 = vextract.low.u32 %v737
        %v739 = vextract.high.u32 %v737
        %v740 = vmul.u32 %v733, %v724
        %v741 = vadd.s32 %v736, %v738
        %vm742 = vc.u32 %v736, %v738
        %v743 = vadd.s32 %v739, 1
        %v744 = vsel %vm742, %v743, %v739
        %v745 = vadd.s32 %v740, %v744
        %v746 = vadd.s32 %v745, 536870912
        %v747 = vshrl.u32 %v746, 30
        %v748 = vshll.u32 %v747, 30
        %v749 = vsub.s32 %v745, %v748
        %vm750 = vcmp.lt.s32.totalorder %v749, 0
        %v751 = vsub.s32 0, %v749
        %v752 = vsel %vm750, %v751, %v749
        %v753 = vclz %v752
        %v754 = vsub.s32 %v753, 2
        %vm755 = vcmp.gt.s32.totalorder 0, %v754
        %v756 = vsel %vm755, 0, %v754
        %v757 = vsub.s32 32, %v756
        %v758 = vshll.u32 %v749, %v756
        %v759 = vshrl.u32 %v741, %v757
        %v760 = vor.u32 %v758, %v759
        %v761 = vsub.s32 4294967266, %v756
        %v762 = vadd.s32 %v761, 127
        %v763 = vshll.u32 %v762, 23
        %v764 = vor.u32 4788187, %v763
        %v765 = vand.u32 2147483647, %v764
        %v767 = vcvt.s32.f32 %v760
        %v768 = vmul.f32 %v767, %v765
        %v769 = vxor.u32 %v768, 2147483648
        %v770 = vsel %vm687, %v769, %v768
        %v771 = vsub.s32 4, %v747
        %v772 = vsel %vm687, %v771, %v747
        %v773 = vsel %vm686, %v681, %v770
        %v774 = vsel %vm686, 0, %v772
        %v775 = vcosq.f32.pop %v773
        %v776 = vsinq.f32.pop %v773
        %vm777 = vweird.f32 %v681
        %v778 = vadd.s32 %v774, 3
        %v779 = vand.u32 %v778, 3
        %vm780 = vcmp.lt.s32.totalorder %v779, 2
        %vm781 = vcmp.eq.s32.totalorder %v779, 0
        %v782 = vxor.u32 %v776, 2147483648
        %v783 = vsel %vm781, %v775, %v782
        %vm784 = vcmp.eq.s32.totalorder %v779, 2
        %v785 = vxor.u32 %v775, 2147483648
        %v786 = vsel %vm784, %v785, %v776
        %v787 = vsel %vm780, %v783, %v786
        %v788 = vsel %vm777, nan, %v787
        %v789 = vand.u32 2147483647, %v682
        %vm790 = vcmp.le.f32.partialorder %v789, 0.7853982
        %vm791 = vcmp.lt.s32.totalorder %v682, 0
        %v792 = vand.u32 %v682, 2139095040
        %v793 = vshrl.u32 %v792, 23
        %v794 = vsub.s32 %v793, 127
        %v795 = vand.u32 2147483647, %v682
        %v796 = vand.u32 %v795, 8388607
        %v797 = vor.u32 %v796, 8388608
        %v798 = vsub.s32 0, %v797
        %v799 = vadd.s32 %v794, 1
        %vm800 = vcmp.gt.s32.totalorder %v799, 0
        %v801 = vsel %vm800, %v799, 0
        %v802 = vshrl.u32 %v801, 5
        %v803 = vand.u32 %v801, 31
        %v804 = vsub.s32 32, %v803
        %v805 = vshrl.u32 683565275, %v804
        %v806 = vshll.u32 683565275, %v803
        %v807 = vshrl.u32 2475754826, %v804
        %v808 = vor.u32 %v806, %v807
        %v809 = vshll.u32 2475754826, %v803
        %v810 = vshrl.u32 2131351028, %v804
        %v811 = vor.u32 %v809, %v810
        %v812 = vshll.u32 2131351028, %v803
        %v813 = vshrl.u32 2102212464, %v804
        %v814 = vor.u32 %v812, %v813
        %v815 = vshll.u32 2102212464, %v803
        %v816 = vshrl.u32 920167782, %v804
        %v817 = vor.u32 %v815, %v816
        %v818 = vshll.u32 920167782, %v803
        %v819 = vshrl.u32 1326507024, %v804
        %v820 = vor.u32 %v818, %v819
        %vm821 = vcmp.lt.s32.totalorder %v802, 1
        %vm822 = vcmp.lt.s32.totalorder %v802, 2
        %vm823 = vcmp.lt.s32.totalorder %v802, 3
        %vm824 = vcmp.lt.s32.totalorder %v802, 4
        %v825 = vsel %vm821, %v805, %v808
        %v826 = vsel %vm824, %v814, 2102212464
        %v827 = vsel %vm823, %v811, %v826
        %v828 = vsel %vm822, %v825, %v827
        %v829 = vsel %vm821, %v808, %v811
        %v830 = vsel %vm824, %v817, 920167782
        %v831 = vsel %vm823, %v814, %v830
        %v832 = vsel %vm822, %v829, %v831
        %v833 = vsel %vm821, %v811, %v814
        %v834 = vsel %vm824, %v820, 1326507024
        %v835 = vsel %vm823, %v817, %v834
        %v836 = vsel %vm822, %v833, %v835
        %v837 = vshll.u32 %v797, 8
        %v838 = vmul.u32.u64.compose %v837, %v836
        %v839 = vextract.low.u32 %v838
        %v840 = vextract.high.u32 %v838
        %v841 = vmul.u32.u64.compose %v837, %v832
        %v842 = vextract.low.u32 %v841
        %v843 = vextract.high.u32 %v841
        %v844 = vmul.u32 %v837, %v828
        %v845 = vadd.s32 %v840, %v842
        %vm846 = vc.u32 %v840, %v842
        %v847 = vadd.s32 %v843, 1
        %v848 = vsel %vm846, %v847, %v843
        %v849 = vadd.s32 %v844, %v848
        %v850 = vadd.s32 %v849, 536870912
        %v851 = vshrl.u32 %v850, 30
        %v852 = vshll.u32 %v851, 30
        %v853 = vsub.s32 %v849, %v852
        %vm854 = vcmp.lt.s32.totalorder %v853, 0
        %v855 = vsub.s32 0, %v853
        %v856 = vsel %vm854, %v855, %v853
        %v857 = vclz %v856
        %v858 = vsub.s32 %v857, 2
        %vm859 = vcmp.gt.s32.totalorder 0, %v858
        %v860 = vsel %vm859, 0, %v858
        %v861 = vsub.s32 32, %v860
        %v862 = vshll.u32 %v853, %v860
        %v863 = vshrl.u32 %v845, %v861
        %v864 = vor.u32 %v862, %v863
        %v865 = vsub.s32 4294967266, %v860
        %v866 = vadd.s32 %v865, 127
        %v867 = vshll.u32 %v866, 23
        %v868 = vor.u32 4788187, %v867
        %v869 = vand.u32 2147483647, %v868
        %v871 = vcvt.s32.f32 %v864
        %v872 = vmul.f32 %v871, %v869
        %v873 = vxor.u32 %v872, 2147483648
        %v874 = vsel %vm791, %v873, %v872
        %v875 = vsub.s32 4, %v851
        %v876 = vsel %vm791, %v875, %v851
        %v877 = vsel %vm790, %v682, %v874
        %v878 = vsel %vm790, 0, %v876
        %v879 = vcosq.f32.pop %v877
        %v880 = vsinq.f32.pop %v877
        %vm881 = vweird.f32 %v682
        %v882 = vadd.s32 %v878, 3
        %v883 = vand.u32 %v882, 3
        %vm884 = vcmp.lt.s32.totalorder %v883, 2
        %vm885 = vcmp.eq.s32.totalorder %v883, 0
        %v886 = vxor.u32 %v880, 2147483648
        %v887 = vsel %vm885, %v879, %v886
        %vm888 = vcmp.eq.s32.totalorder %v883, 2
        %v889 = vxor.u32 %v879, 2147483648
        %v890 = vsel %vm888, %v889, %v880
        %v891 = vsel %vm884, %v887, %v890
        %v892 = vsel %vm881, nan, %v891
        %v893 = vand.u32 2147483647, %v683
        %vm894 = vcmp.le.f32.partialorder %v893, 0.7853982
        %vm895 = vcmp.lt.s32.totalorder %v683, 0
        %v896 = vand.u32 %v683, 2139095040
        %v897 = vshrl.u32 %v896, 23
        %v898 = vsub.s32 %v897, 127
        %v899 = vand.u32 2147483647, %v683
        %v900 = vand.u32 %v899, 8388607
        %v901 = vor.u32 %v900, 8388608
        %v902 = vsub.s32 0, %v901
        %v903 = vadd.s32 %v898, 1
        %vm904 = vcmp.gt.s32.totalorder %v903, 0
        %v905 = vsel %vm904, %v903, 0
        %v906 = vshrl.u32 %v905, 5
        %v907 = vand.u32 %v905, 31
        %v908 = vsub.s32 32, %v907
        %v909 = vshrl.u32 683565275, %v908
        %v910 = vshll.u32 683565275, %v907
        %v911 = vshrl.u32 2475754826, %v908
        %v912 = vor.u32 %v910, %v911
        %v913 = vshll.u32 2475754826, %v907
        %v914 = vshrl.u32 2131351028, %v908
        %v915 = vor.u32 %v913, %v914
        %v916 = vshll.u32 2131351028, %v907
        %v917 = vshrl.u32 2102212464, %v908
        %v918 = vor.u32 %v916, %v917
        %v919 = vshll.u32 2102212464, %v907
        %v920 = vshrl.u32 920167782, %v908
        %v921 = vor.u32 %v919, %v920
        %v922 = vshll.u32 920167782, %v907
        %v923 = vshrl.u32 1326507024, %v908
        %v924 = vor.u32 %v922, %v923
        %vm925 = vcmp.lt.s32.totalorder %v906, 1
        %vm926 = vcmp.lt.s32.totalorder %v906, 2
        %vm927 = vcmp.lt.s32.totalorder %v906, 3
        %vm928 = vcmp.lt.s32.totalorder %v906, 4
        %v929 = vsel %vm925, %v909, %v912
        %v930 = vsel %vm928, %v918, 2102212464
        %v931 = vsel %vm927, %v915, %v930
        %v932 = vsel %vm926, %v929, %v931
        %v933 = vsel %vm925, %v912, %v915
        %v934 = vsel %vm928, %v921, 920167782
        %v935 = vsel %vm927, %v918, %v934
        %v936 = vsel %vm926, %v933, %v935
        %v937 = vsel %vm925, %v915, %v918
        %v938 = vsel %vm928, %v924, 1326507024
        %v939 = vsel %vm927, %v921, %v938
        %v940 = vsel %vm926, %v937, %v939
        %v941 = vshll.u32 %v901, 8
        %v942 = vmul.u32.u64.compose %v941, %v940
        %v943 = vextract.low.u32 %v942
        %v944 = vextract.high.u32 %v942
        %v945 = vmul.u32.u64.compose %v941, %v936
        %v946 = vextract.low.u32 %v945
        %v947 = vextract.high.u32 %v945
        %v948 = vmul.u32 %v941, %v932
        %v949 = vadd.s32 %v944, %v946
        %vm950 = vc.u32 %v944, %v946
        %v951 = vadd.s32 %v947, 1
        %v952 = vsel %vm950, %v951, %v947
        %v953 = vadd.s32 %v948, %v952
        %v954 = vadd.s32 %v953, 536870912
        %v955 = vshrl.u32 %v954, 30
        %v956 = vshll.u32 %v955, 30
        %v957 = vsub.s32 %v953, %v956
        %vm958 = vcmp.lt.s32.totalorder %v957, 0
        %v959 = vsub.s32 0, %v957
        %v960 = vsel %vm958, %v959, %v957
        %v961 = vclz %v960
        %v962 = vsub.s32 %v961, 2
        %vm963 = vcmp.gt.s32.totalorder 0, %v962
        %v964 = vsel %vm963, 0, %v962
        %v965 = vsub.s32 32, %v964
        %v966 = vshll.u32 %v957, %v964
        %v967 = vshrl.u32 %v949, %v965
        %v968 = vor.u32 %v966, %v967
        %v969 = vsub.s32 4294967266, %v964
        %v970 = vadd.s32 %v969, 127
        %v971 = vshll.u32 %v970, 23
        %v972 = vor.u32 4788187, %v971
        %v973 = vand.u32 2147483647, %v972
        %v975 = vcvt.s32.f32 %v968
        %v976 = vmul.f32 %v975, %v973
        %v977 = vxor.u32 %v976, 2147483648
        %v978 = vsel %vm895, %v977, %v976
        %v979 = vsub.s32 4, %v955
        %v980 = vsel %vm895, %v979, %v955
        %v981 = vsel %vm894, %v683, %v978
        %v982 = vsel %vm894, 0, %v980
        %v983 = vcosq.f32.pop %v981
        %v984 = vsinq.f32.pop %v981
        %vm985 = vweird.f32 %v683
        %v986 = vadd.s32 %v982, 3
        %v987 = vand.u32 %v986, 3
        %vm988 = vcmp.lt.s32.totalorder %v987, 2
        %vm989 = vcmp.eq.s32.totalorder %v987, 0
        %v990 = vxor.u32 %v984, 2147483648
        %v991 = vsel %vm989, %v983, %v990
        %vm992 = vcmp.eq.s32.totalorder %v987, 2
        %v993 = vxor.u32 %v983, 2147483648
        %v994 = vsel %vm992, %v993, %v984
        %v995 = vsel %vm988, %v991, %v994
        %v996 = vsel %vm985, nan, %v995
        %v997 = vand.u32 2147483647, %v684
        %vm998 = vcmp.le.f32.partialorder %v997, 0.7853982
        %vm999 = vcmp.lt.s32.totalorder %v684, 0
        %v1000 = vand.u32 %v684, 2139095040
        %v1001 = vshrl.u32 %v1000, 23
        %v1002 = vsub.s32 %v1001, 127
        %v1003 = vand.u32 2147483647, %v684
        %v1004 = vand.u32 %v1003, 8388607
        %v1005 = vor.u32 %v1004, 8388608
        %v1006 = vsub.s32 0, %v1005
        %v1007 = vadd.s32 %v1002, 1
        %vm1008 = vcmp.gt.s32.totalorder %v1007, 0
        %v1009 = vsel %vm1008, %v1007, 0
        %v1010 = vshrl.u32 %v1009, 5
        %v1011 = vand.u32 %v1009, 31
        %v1012 = vsub.s32 32, %v1011
        %v1013 = vshrl.u32 683565275, %v1012
        %v1014 = vshll.u32 683565275, %v1011
        %v1015 = vshrl.u32 2475754826, %v1012
        %v1016 = vor.u32 %v1014, %v1015
        %v1017 = vshll.u32 2475754826, %v1011
        %v1018 = vshrl.u32 2131351028, %v1012
        %v1019 = vor.u32 %v1017, %v1018
        %v1020 = vshll.u32 2131351028, %v1011
        %v1021 = vshrl.u32 2102212464, %v1012
        %v1022 = vor.u32 %v1020, %v1021
        %v1023 = vshll.u32 2102212464, %v1011
        %v1024 = vshrl.u32 920167782, %v1012
        %v1025 = vor.u32 %v1023, %v1024
        %v1026 = vshll.u32 920167782, %v1011
        %v1027 = vshrl.u32 1326507024, %v1012
        %v1028 = vor.u32 %v1026, %v1027
        %vm1029 = vcmp.lt.s32.totalorder %v1010, 1
        %vm1030 = vcmp.lt.s32.totalorder %v1010, 2
        %vm1031 = vcmp.lt.s32.totalorder %v1010, 3
        %vm1032 = vcmp.lt.s32.totalorder %v1010, 4
        %v1033 = vsel %vm1029, %v1013, %v1016
        %v1034 = vsel %vm1032, %v1022, 2102212464
        %v1035 = vsel %vm1031, %v1019, %v1034
        %v1036 = vsel %vm1030, %v1033, %v1035
        %v1037 = vsel %vm1029, %v1016, %v1019
        %v1038 = vsel %vm1032, %v1025, 920167782
        %v1039 = vsel %vm1031, %v1022, %v1038
        %v1040 = vsel %vm1030, %v1037, %v1039
        %v1041 = vsel %vm1029, %v1019, %v1022
        %v1042 = vsel %vm1032, %v1028, 1326507024
        %v1043 = vsel %vm1031, %v1025, %v1042
        %v1044 = vsel %vm1030, %v1041, %v1043
        %v1045 = vshll.u32 %v1005, 8
        %v1046 = vmul.u32.u64.compose %v1045, %v1044
        %v1047 = vextract.low.u32 %v1046
        %v1048 = vextract.high.u32 %v1046
        %v1049 = vmul.u32.u64.compose %v1045, %v1040
        %v1050 = vextract.low.u32 %v1049
        %v1051 = vextract.high.u32 %v1049
        %v1052 = vmul.u32 %v1045, %v1036
        %v1053 = vadd.s32 %v1048, %v1050
        %vm1054 = vc.u32 %v1048, %v1050
        %v1055 = vadd.s32 %v1051, 1
        %v1056 = vsel %vm1054, %v1055, %v1051
        %v1057 = vadd.s32 %v1052, %v1056
        %v1058 = vadd.s32 %v1057, 536870912
        %v1059 = vshrl.u32 %v1058, 30
        %v1060 = vshll.u32 %v1059, 30
        %v1061 = vsub.s32 %v1057, %v1060
        %vm1062 = vcmp.lt.s32.totalorder %v1061, 0
        %v1063 = vsub.s32 0, %v1061
        %v1064 = vsel %vm1062, %v1063, %v1061
        %v1065 = vclz %v1064
        %v1066 = vsub.s32 %v1065, 2
        %vm1067 = vcmp.gt.s32.totalorder 0, %v1066
        %v1068 = vsel %vm1067, 0, %v1066
        %v1069 = vsub.s32 32, %v1068
        %v1070 = vshll.u32 %v1061, %v1068
        %v1071 = vshrl.u32 %v1053, %v1069
        %v1072 = vor.u32 %v1070, %v1071
        %v1073 = vsub.s32 4294967266, %v1068
        %v1074 = vadd.s32 %v1073, 127
        %v1075 = vshll.u32 %v1074, 23
        %v1076 = vor.u32 4788187, %v1075
        %v1077 = vand.u32 2147483647, %v1076
        %v1079 = vcvt.s32.f32 %v1072
        %v1080 = vmul.f32 %v1079, %v1077
        %v1081 = vxor.u32 %v1080, 2147483648
        %v1082 = vsel %vm999, %v1081, %v1080
        %v1083 = vsub.s32 4, %v1059
        %v1084 = vsel %vm999, %v1083, %v1059
        %v1085 = vsel %vm998, %v684, %v1082
        %v1086 = vsel %vm998, 0, %v1084
        %v1087 = vcosq.f32.pop %v1085
        %v1088 = vsinq.f32.pop %v1085
        %vm1089 = vweird.f32 %v684
        %v1090 = vadd.s32 %v1086, 3
        %v1091 = vand.u32 %v1090, 3
        %vm1092 = vcmp.lt.s32.totalorder %v1091, 2
        %vm1093 = vcmp.eq.s32.totalorder %v1091, 0
        %v1094 = vxor.u32 %v1088, 2147483648
        %v1095 = vsel %vm1093, %v1087, %v1094
        %vm1096 = vcmp.eq.s32.totalorder %v1091, 2
        %v1097 = vxor.u32 %v1087, 2147483648
        %v1098 = vsel %vm1096, %v1097, %v1088
        %v1099 = vsel %vm1092, %v1095, %v1098
        %v1100 = vsel %vm1089, nan, %v1099
        %1101 = vst [vmem:[%s188 + $0x20] sm:$0xff] %v788
        %1102 = vst [vmem:[%s188 + $0x28] sm:$0xff] %v892
        %1103 = vst [vmem:[%s188 + $0x30] sm:$0xff] %v996
        %1104 = vst [vmem:[%s188 + $0x38] sm:$0xff] %v1100
        %s1105 = sand.u32 %s109, 1
        %s1106 = scalar_lea.sflag [#allocation3], %s1105
        %s1107 = sand.u32 %s109, 1
        %s1108 = smul.addr %s1107, 64
        %s1109 = scalar_lea.vmem [#allocation2], %s1108
        // Predicated region
        $region33: #{tpu_custom_call.1} parent=31 // pred_check
          %p1110 = pneg %p119
        $region34: #{tpu_custom_call.1} parent=31 // pred_check_branch
          %1112 = sbr.rel (%p1110) target = $region36
        $region35: #{tpu_custom_call.1} parent=31 // pred_region
          %s1113 = smul.u32 2, %s22
          %s1115 = ssub.s32 1024, 1024
          %1116 = vsyncadd %s1106, %s1115
          %s1117 = smul.addr %s21, 8
          %s1118 = sadd.s32 %s1113, %s1117
          %s1119 = smul.addr %s1118, 128
          %s1120 = scalar_lea.hbm %s3, %s1119
          %s1121 = sshll.u32 %s1109, 4
          %s1122 = int_to_ptr.vmem [resolvable:$true] %s1121
          %1127 = dma.vmem_to_hbm [thread:$0]  %s1122, 1024, %s1120, %s1106, 256, 256, 16
        $region36: #{tpu_custom_call.1} parent=31 // pred_fallthru
          _
      $region32: #{tpu_custom_call.1} parent=5 // pred_fallthru
        _
      %p1128 = scmp.le.s32.totalorder 2, %s12
      // Predicated region
      $region37: #{tpu_custom_call.1} parent=5 // pred_check
        %p1129 = pneg %p1128
      $region38: #{tpu_custom_call.1} parent=5 // pred_check_branch
        %1131 = sbr.rel (%p1129) target = $region40
      $region39: #{tpu_custom_call.1} parent=5 // pred_region
        %s1132 = ssub.s32 %s12, 2
        // Predicated region
        $region41: #{tpu_custom_call.1} parent=39 // pred_check
          %p1133 = pneg %p125
        $region42: #{tpu_custom_call.1} parent=39 // pred_check_branch
          %1135 = sbr.rel (%p1133) target = $region44
        $region43: #{tpu_custom_call.1} parent=39 // pred_region
          %s1136 = sand.u32 %s110, 1
          %s1137 = scalar_lea.sflag [#allocation3], %s1136
          %s1138 = sand.u32 %s110, 1
          %s1139 = smul.addr %s1138, 64
          %s1140 = scalar_lea.vmem [#allocation2], %s1139
          %1141 = dma.done %s1137, 1024
        $region44: #{tpu_custom_call.1} parent=39 // pred_fallthru
          _
      $region40: #{tpu_custom_call.1} parent=5 // pred_fallthru
        _
    $region6: #{tpu_custom_call.1} parent=1 // loop_footer
      %s16 = sadd.s32 1, %s12
    $region7: #{tpu_custom_call.1} parent=1 // loop_footer_branch
      %11 = sbr.rel target = $region3
    $region8: #{tpu_custom_call.1} parent=1 // loop_exit
      _
    %1142 = vsyncpa [#allocation3], 1
    %s1143 = scalar_lea.sflag [#allocation3], 1
    %1144 = vsyncpa %s1143, 1

</llo_original>
